<compile_context>
chip_gen: v7x
topology: tpu7x:2x2x1
jax: 0.10.0
libtpu: 0.0.40
codegen_flags: <defaults>
</compile_context>

<pallas_src>
import functools

import jax
import jax.numpy as jnp
from jax.experimental import pallas as pl
from jax.experimental.pallas import tpu as pltpu


def _round_up(n, m=128):
    return ((n + m - 1) // m) * m


def gin_stack_kernel(eps_ref, x_ref, adj_ref, *refs, num_layers, residuals,
                     mxu_dtype):
    """All GINLayers fused; x stays resident in VMEM/vregs across layers.

    eps_ref: (L,)            SMEM, one eps per layer
    x_ref:   (B*N, Dp)       node features, batch folded into MXU M rows
    adj_ref: (B*N, B*N)      block-diagonal adjacency (kron(I_B, adj)), bf16
    refs:    (w1, b1, w2, b2) per layer (w* in mxu_dtype, b* f32), out ref last
    """
    o_ref = refs[-1]
    w_refs = refs[:-1]

    adj = adj_ref[...]                          # loaded once, reused every layer
    xf = x_ref[...].astype(jnp.float32)         # (B*N, Dp) running value, f32

    for l in range(num_layers):                 # static unroll, L is tiny
        w1 = w_refs[4 * l + 0][...]             # (Dp,  Hp)   mxu_dtype
        b1 = w_refs[4 * l + 1][...]             # (1,   Hp)   f32, broadcast-add
        w2 = w_refs[4 * l + 2][...]             # (Hp,  Dp')  mxu_dtype
        b2 = w_refs[4 * l + 3][...]             # (1,   Dp')  f32
        scale = 1.0 + eps_ref[l]                # scalar, read once from SMEM

        # Neighbor aggregation: block-diag(adj) @ x_flat == adj @ x[b] per batch.
        # One MXU push instead of B small pushes + a concatenate.
        neighs = jnp.dot(adj, xf.astype(mxu_dtype),
                         preferred_element_type=jnp.float32)
        h = scale * xf + neighs                 # f32 elementwise (v5e-safe)

        # 2-layer MLP on the flattened (B*N, Dp) view:
        # Linear -> ReLU -> (Dropout == identity) -> Linear -> (Dropout == identity)
        h1 = jnp.dot(h.astype(mxu_dtype), w1,
                     preferred_element_type=jnp.float32) + b1
        h1 = jnp.maximum(h1, 0.0)
        h2 = jnp.dot(h1.astype(mxu_dtype), w2,
                     preferred_element_type=jnp.float32) + b2

        # Residual only when original in/out feature dims match (static flag).
        xf = h2 + xf if residuals[l] else h2

    o_ref[...] = xf.astype(o_ref.dtype)         # lane-dense, unmasked store


def gin_forward(x, adj, params, mxu_dtype=jnp.bfloat16):
    """GIN.forward: all GINLayers fused into a single grid-less pallas_call.

    x: [B, N, D], adj: [N, N], params: list of dicts with eps/w1/b1/w2/b2.
    Weights are stored [in, out] so the kernel computes x @ W + b
    (equivalent to PyTorch's x @ weight.T + bias).
    mxu_dtype: dtype of MXU operands (bf16 default; jnp.float32 for exact f32).
    """
    B, N, D = x.shape
    L = len(params)
    rows = B * N

    # Static residual flags from the ORIGINAL dims (PyTorch: shapes match).
    residuals = []
    d_in = D
    for p in params:
        d_out = p["w2"].shape[1]
        residuals.append(d_out == d_in)
        d_in = d_out
    d_last = d_in

    # Pad every feature dim up to a multiple of 128 lanes with exact zeros
    # (free XLA pads in the wrapper); padding columns stay zero through the
    # whole stack, so slicing them off afterwards is exact.
    def pad2(a, r, c):
        return jnp.pad(a, ((0, r - a.shape[0]), (0, c - a.shape[1])))

    Dp = _round_up(D)
    x_flat = pad2(x.reshape(rows, D), rows, Dp)

    weight_args = []
    flops = 0
    d_in_p = Dp
    for p in params:
        h = p["w1"].shape[1]
        d_out = p["w2"].shape[1]
        hp, d_out_p = _round_up(h), _round_up(d_out)
        weight_args += [
            pad2(p["w1"], d_in_p, hp).astype(mxu_dtype),
            pad2(p["b1"], 1, hp),                       # bias stays f32
            pad2(p["w2"], hp, d_out_p).astype(mxu_dtype),
            pad2(p["b2"], 1, d_out_p),
        ]
        flops += 2 * rows * rows * d_in_p               # adjacency matmul
        flops += 2 * rows * d_in_p * hp                 # linear 1
        flops += 2 * rows * hp * d_out_p                # linear 2
        flops += 6 * rows * max(d_in_p, hp, d_out_p)    # elementwise-ish
        d_in_p = d_out_p
    d_last_p = d_in_p

    eps_vec = jnp.concatenate(
        [p["eps"].reshape(1).astype(jnp.float32) for p in params])  # (L,)

    # Block-diagonal adjacency: bmm(adj.expand(B,-1,-1), x) == kron(I_B, adj) @ x_flat.
    # bf16 is lossless for the 0/1 entries of this adjacency.
    adj_bd = jnp.kron(jnp.eye(B, dtype=adj.dtype), adj).astype(mxu_dtype)

    all_inputs = [eps_vec, x_flat, adj_bd] + weight_args
    bytes_accessed = sum(int(a.size) * a.dtype.itemsize for a in all_inputs)
    bytes_accessed += rows * d_last_p * x.dtype.itemsize

    kernel = functools.partial(
        gin_stack_kernel,
        num_layers=L, residuals=tuple(residuals), mxu_dtype=mxu_dtype)

    vmem = pl.BlockSpec(memory_space=pltpu.MemorySpace.VMEM)
    smem = pl.BlockSpec(memory_space=pltpu.MemorySpace.SMEM)

    out_flat = pl.pallas_call(
        kernel,
        out_shape=jax.ShapeDtypeStruct((rows, d_last_p), x.dtype),
        in_specs=[smem] + [vmem] * (2 + 4 * L),          # eps | x, adj_bd, weights
        out_specs=vmem,
        cost_estimate=pl.CostEstimate(
            flops=int(flops), transcendentals=0,
            bytes_accessed=int(bytes_accessed)),
    )(eps_vec, x_flat, adj_bd, *weight_args)

    return out_flat[:, :d_last].reshape(B, N, d_last)


# ---------------- deterministic parameter init (synthetic, not a checkpoint) --


def init_linear(key, fan_in, fan_out):
    """Mimics kaiming_uniform_(a=0.1, leaky_relu) weight + uniform(0, 0.1) bias."""
    kw, kb = jax.random.split(key)
    gain = (2.0 / (1.0 + 0.1 ** 2)) ** 0.5
    bound = gain * (3.0 / fan_in) ** 0.5
    w = jax.random.uniform(kw, (fan_in, fan_out), jnp.float32, -bound, bound)
    b = jax.random.uniform(kb, (1, fan_out), jnp.float32, 0.0, 0.1)
    return w, b


def init_gin_params(key, nodes_info, eps_init=0.0):
    """nodes_info: list of per-layer MLP node lists, e.g. [[32, 64, 32], [32, 64, 32]]."""
    params = []
    for layer_nodes in nodes_info:
        assert len(layer_nodes) == 3, "this kernel fuses a 2-layer MLP per GINLayer"
        key, k1, k2 = jax.random.split(key, 3)
        w1, b1 = init_linear(k1, layer_nodes[0], layer_nodes[1])
        w2, b2 = init_linear(k2, layer_nodes[1], layer_nodes[2])
        params.append({
            "eps": jnp.full((1,), eps_init, jnp.float32),
            "w1": w1, "b1": b1, "w2": w2, "b2": b2,
        })
    return params


# ---------------- pure-JAX reference for correctness check ----------------


def gin_forward_ref(x, adj, params, mxu_dtype=jnp.bfloat16):
    """Reference mirroring the kernel's MXU operand dtype (f32 accumulation)."""
    adj_m = adj.astype(mxu_dtype)
    xf = x.astype(jnp.float32)
    for p in params:
        neighs = jnp.einsum("nm,bmd->bnd", adj_m, xf.astype(mxu_dtype),
                            preferred_element_type=jnp.float32)
        h = (1.0 + p["eps"][0]) * xf + neighs
        h1 = jnp.einsum("bnd,dh->bnh", h.astype(mxu_dtype),
                        p["w1"].astype(mxu_dtype),
                        preferred_element_type=jnp.float32) + p["b1"]
        h1 = jnp.maximum(h1, 0.0)
        h2 = jnp.einsum("bnh,hd->bnd", h1.astype(mxu_dtype),
                        p["w2"].astype(mxu_dtype),
                        preferred_element_type=jnp.float32) + p["b2"]
        xf = h2 + xf if h2.shape == xf.shape else h2
    return xf


if __name__ == "__main__":
    key = jax.random.PRNGKey(0)
    B, N, D, H = 2, 8, 32, 64            # batch, nodes, feature dim, MLP hidden
    nodes_info = [[D, H, D], [D, H, D]]  # 2 GIN layers, each a 2-layer MLP

    kx, kadj, kp = jax.random.split(key, 3)
    x = jax.random.normal(kx, (B, N, D), jnp.float32)
    adj = (jax.random.uniform(kadj, (N, N)) < 0.4).astype(jnp.float32)
    adj = adj + adj.T + jnp.eye(N, dtype=jnp.float32)   # symmetric w/ self-loops
    adj = jnp.clip(adj, 0.0, 1.0)

    params = init_gin_params(kp, nodes_info, eps_init=0.0)

    out = gin_forward(x, adj, params)
    out = jax.block_until_ready(out)

    ref = gin_forward_ref(x, adj, params)
    assert out.shape == (B, N, D)
    # Kernel and reference use identical bf16 MXU-operand rounding; tolerance
    # only needs to absorb f32 accumulation-order noise (and its second-order
    # effect on downstream bf16 casts).
    assert jnp.allclose(out, ref, atol=1e-2, rtol=1e-2), "mismatch vs reference"

    print("KERNEL_OK")
</pallas_src>

<mosaic_0001>
module attributes {stable_mosaic.version = 11 : i64} {
  func.func @gin_stack_kernel(%arg0: memref<2xf32, #tpu.memory_space<smem>>, %arg1: memref<16x128xf32, #tpu.memory_space<vmem>>, %arg2: memref<16x16xbf16, #tpu.memory_space<vmem>>, %arg3: memref<128x128xbf16, #tpu.memory_space<vmem>>, %arg4: memref<1x128xf32, #tpu.memory_space<vmem>>, %arg5: memref<128x128xbf16, #tpu.memory_space<vmem>>, %arg6: memref<1x128xf32, #tpu.memory_space<vmem>>, %arg7: memref<128x128xbf16, #tpu.memory_space<vmem>>, %arg8: memref<1x128xf32, #tpu.memory_space<vmem>>, %arg9: memref<128x128xbf16, #tpu.memory_space<vmem>>, %arg10: memref<1x128xf32, #tpu.memory_space<vmem>>, %arg11: memref<16x128xf32, #tpu.memory_space<vmem>>) attributes {dimension_semantics = [], scalar_prefetch = 0 : i64, scratch_operands = 0 : i64, tpu.core_type = #tpu.core_type<tc>} {
    %c0 = arith.constant 0 : index
    %c0_0 = arith.constant 0 : index
    %0 = vector.load %arg2[%c0, %c0_0] : memref<16x16xbf16, #tpu.memory_space<vmem>>, vector<16x16xbf16>
    %c0_1 = arith.constant 0 : index
    %c0_2 = arith.constant 0 : index
    %1 = vector.load %arg1[%c0_1, %c0_2] : memref<16x128xf32, #tpu.memory_space<vmem>>, vector<16x128xf32>
    %c0_3 = arith.constant 0 : index
    %c0_4 = arith.constant 0 : index
    %2 = vector.load %arg3[%c0_3, %c0_4] : memref<128x128xbf16, #tpu.memory_space<vmem>>, vector<128x128xbf16>
    %c0_5 = arith.constant 0 : index
    %c0_6 = arith.constant 0 : index
    %3 = vector.load %arg4[%c0_5, %c0_6] : memref<1x128xf32, #tpu.memory_space<vmem>>, vector<1x128xf32>
    %c0_7 = arith.constant 0 : index
    %c0_8 = arith.constant 0 : index
    %4 = vector.load %arg5[%c0_7, %c0_8] : memref<128x128xbf16, #tpu.memory_space<vmem>>, vector<128x128xbf16>
    %c0_9 = arith.constant 0 : index
    %c0_10 = arith.constant 0 : index
    %5 = vector.load %arg6[%c0_9, %c0_10] : memref<1x128xf32, #tpu.memory_space<vmem>>, vector<1x128xf32>
    %c0_11 = arith.constant 0 : index
    %6 = memref.load %arg0[%c0_11] : memref<2xf32, #tpu.memory_space<smem>>
    %cst = arith.constant 1.000000e+00 : f32
    %7 = arith.addf %cst, %6 : f32
    %8 = arith.truncf %1 : vector<16x128xf32> to vector<16x128xbf16>
    %cst_12 = arith.constant dense<0.000000e+00> : vector<16x128xf32>
    %9 = tpu.matmul %0, %8, %cst_12 {dimension_numbers = #tpu.dot_dimension_numbers<[1], [0], [0], [1], [0, 0, 1, 1], [], []>} : vector<16x16xbf16>, vector<16x128xbf16>, vector<16x128xf32> -> vector<16x128xf32>
    %10 = vector.broadcast %7 : f32 to vector<16x128xf32>
    %11 = arith.mulf %10, %1 : vector<16x128xf32>
    %12 = arith.addf %11, %9 : vector<16x128xf32>
    %13 = arith.truncf %12 : vector<16x128xf32> to vector<16x128xbf16>
    %cst_13 = arith.constant dense<0.000000e+00> : vector<16x128xf32>
    %14 = tpu.matmul %13, %2, %cst_13 {dimension_numbers = #tpu.dot_dimension_numbers<[1], [0], [0], [1], [0, 0, 1, 1], [], []>} : vector<16x128xbf16>, vector<128x128xbf16>, vector<16x128xf32> -> vector<16x128xf32>
    %15 = vector.broadcast %3 : vector<1x128xf32> to vector<16x128xf32>
    %16 = arith.addf %14, %15 : vector<16x128xf32>
    %cst_14 = arith.constant 0.000000e+00 : f32
    %17 = vector.broadcast %cst_14 : f32 to vector<16x128xf32>
    %18 = arith.maximumf %16, %17 : vector<16x128xf32>
    %19 = arith.truncf %18 : vector<16x128xf32> to vector<16x128xbf16>
    %cst_15 = arith.constant dense<0.000000e+00> : vector<16x128xf32>
    %20 = tpu.matmul %19, %4, %cst_15 {dimension_numbers = #tpu.dot_dimension_numbers<[1], [0], [0], [1], [0, 0, 1, 1], [], []>} : vector<16x128xbf16>, vector<128x128xbf16>, vector<16x128xf32> -> vector<16x128xf32>
    %21 = vector.broadcast %5 : vector<1x128xf32> to vector<16x128xf32>
    %22 = arith.addf %20, %21 : vector<16x128xf32>
    %23 = arith.addf %22, %1 : vector<16x128xf32>
    %c0_16 = arith.constant 0 : index
    %c0_17 = arith.constant 0 : index
    %24 = vector.load %arg7[%c0_16, %c0_17] : memref<128x128xbf16, #tpu.memory_space<vmem>>, vector<128x128xbf16>
    %c0_18 = arith.constant 0 : index
    %c0_19 = arith.constant 0 : index
    %25 = vector.load %arg8[%c0_18, %c0_19] : memref<1x128xf32, #tpu.memory_space<vmem>>, vector<1x128xf32>
    %c0_20 = arith.constant 0 : index
    %c0_21 = arith.constant 0 : index
    %26 = vector.load %arg9[%c0_20, %c0_21] : memref<128x128xbf16, #tpu.memory_space<vmem>>, vector<128x128xbf16>
    %c0_22 = arith.constant 0 : index
    %c0_23 = arith.constant 0 : index
    %27 = vector.load %arg10[%c0_22, %c0_23] : memref<1x128xf32, #tpu.memory_space<vmem>>, vector<1x128xf32>
    %c1 = arith.constant 1 : index
    %28 = memref.load %arg0[%c1] : memref<2xf32, #tpu.memory_space<smem>>
    %cst_24 = arith.constant 1.000000e+00 : f32
    %29 = arith.addf %cst_24, %28 : f32
    %30 = arith.truncf %23 : vector<16x128xf32> to vector<16x128xbf16>
    %cst_25 = arith.constant dense<0.000000e+00> : vector<16x128xf32>
    %31 = tpu.matmul %0, %30, %cst_25 {dimension_numbers = #tpu.dot_dimension_numbers<[1], [0], [0], [1], [0, 0, 1, 1], [], []>} : vector<16x16xbf16>, vector<16x128xbf16>, vector<16x128xf32> -> vector<16x128xf32>
    %32 = vector.broadcast %29 : f32 to vector<16x128xf32>
    %33 = arith.mulf %32, %23 : vector<16x128xf32>
    %34 = arith.addf %33, %31 : vector<16x128xf32>
    %35 = arith.truncf %34 : vector<16x128xf32> to vector<16x128xbf16>
    %cst_26 = arith.constant dense<0.000000e+00> : vector<16x128xf32>
    %36 = tpu.matmul %35, %24, %cst_26 {dimension_numbers = #tpu.dot_dimension_numbers<[1], [0], [0], [1], [0, 0, 1, 1], [], []>} : vector<16x128xbf16>, vector<128x128xbf16>, vector<16x128xf32> -> vector<16x128xf32>
    %37 = vector.broadcast %25 : vector<1x128xf32> to vector<16x128xf32>
    %38 = arith.addf %36, %37 : vector<16x128xf32>
    %cst_27 = arith.constant 0.000000e+00 : f32
    %39 = vector.broadcast %cst_27 : f32 to vector<16x128xf32>
    %40 = arith.maximumf %38, %39 : vector<16x128xf32>
    %41 = arith.truncf %40 : vector<16x128xf32> to vector<16x128xbf16>
    %cst_28 = arith.constant dense<0.000000e+00> : vector<16x128xf32>
    %42 = tpu.matmul %41, %26, %cst_28 {dimension_numbers = #tpu.dot_dimension_numbers<[1], [0], [0], [1], [0, 0, 1, 1], [], []>} : vector<16x128xbf16>, vector<128x128xbf16>, vector<16x128xf32> -> vector<16x128xf32>
    %43 = vector.broadcast %27 : vector<1x128xf32> to vector<16x128xf32>
    %44 = arith.addf %42, %43 : vector<16x128xf32>
    %45 = arith.addf %44, %23 : vector<16x128xf32>
    %c0_29 = arith.constant 0 : index
    %c0_30 = arith.constant 0 : index
    %46 = vector.load %arg11[%c0_29, %c0_30] : memref<16x128xf32, #tpu.memory_space<vmem>>, vector<16x128xf32>
    tpu.vector_store %arg11[%c0_29, %c0_30], %45 {strides = array<i32>} : memref<16x128xf32, #tpu.memory_space<vmem>>, vector<16x128xf32>,
    return
  }
}

</mosaic_0001>

<llo_original>
// kernel: tpu_custom_call.1
$region0: #{tpu_custom_call.1}
  #allocation0 [shape = 'u32[]', space=smem, size = 0x4, offset = 0x4, fixed_abs, tag = 'smem constant byte address 0x4 - core index']
  #allocation1 [shape = 'u32[144,128]{1,0:T(1,128)}', space=vmem, size = 0x12000, scoped, tag = 'internal scratch']
  %s0 = inlined_call_operand.hbm [shape: f32[2], index: 0, kind: input, shape index: {}]
  %s1 = inlined_call_operand.hbm [shape: f32[16,128], index: 1, kind: input, shape index: {}]
  %s2 = inlined_call_operand.hbm [shape: bf16[16,16], index: 2, kind: input, shape index: {}]
  %s3 = inlined_call_operand.hbm [shape: bf16[128,128], index: 3, kind: input, shape index: {}]
  %s4 = inlined_call_operand.vmem [shape: f32[1,128], index: 4, kind: input, shape index: {}]
  %s5 = inlined_call_operand.hbm [shape: bf16[128,128], index: 5, kind: input, shape index: {}]
  %s6 = inlined_call_operand.vmem [shape: f32[1,128], index: 6, kind: input, shape index: {}]
  %s7 = inlined_call_operand.hbm [shape: bf16[128,128], index: 7, kind: input, shape index: {}]
  %s8 = inlined_call_operand.vmem [shape: f32[1,128], index: 8, kind: input, shape index: {}]
  %s9 = inlined_call_operand.hbm [shape: bf16[128,128], index: 9, kind: input, shape index: {}]
  %s10 = inlined_call_operand.vmem [shape: f32[1,128], index: 10, kind: input, shape index: {}]
  %s11 = inlined_call_operand.hbm [shape: f32[16,128], index: 11, kind: output, shape index: {}]
  %s12 = sld [smem:[#allocation0]]
  $region82: #{tpu_custom_call.1} parent=0
    _
  %s14 = ssub.s32 1, %s12
  %s15 = scalar_select 0, %s14, %s12
  $region1: #{tpu_custom_call.1} parent=0
    #allocation2 [shape = 'u8[512]{0}', space=smem, size = 0x200, scoped, tag = 'input window, operand 0, single buffered']
    #allocation3 [shape = 's32[1]{0}', space=sflag, size = 0x4, scoped, tag = 'scoped memory for tpu_custom_call.1']
    #allocation4 [shape = 's32[1]{0}', space=sflag, size = 0x4, scoped, tag = 'scoped memory for tpu_custom_call.1']
    #allocation5 [shape = 's32[1]{0}', space=sflag, size = 0x4, scoped, tag = 'scoped memory for tpu_custom_call.1']
    #allocation6 [shape = 'u8[8192]{0}', space=vmem, size = 0x2000, scoped, tag = 'input window, operand 1, single buffered']
    #allocation7 [shape = 'u8[4096]{0}', space=vmem, size = 0x1000, scoped, tag = 'input window, operand 2, single buffered']
    #allocation8 [shape = 's32[1]{0}', space=sflag, size = 0x4, scoped, tag = 'scoped memory for tpu_custom_call.1']
    #allocation9 [shape = 'u8[32768]{0}', space=vmem, size = 0x8000, scoped, tag = 'input window, operand 3, single buffered']
    #allocation10 [shape = 'u8[32768]{0}', space=vmem, size = 0x8000, scoped, tag = 'input window, operand 5, single buffered']
    #allocation11 [shape = 's32[1]{0}', space=sflag, size = 0x4, scoped, tag = 'scoped memory for tpu_custom_call.1']
    #allocation12 [shape = 'u8[32768]{0}', space=vmem, size = 0x8000, scoped, tag = 'input window, operand 7, single buffered']
    #allocation13 [shape = 'u8[32768]{0}', space=vmem, size = 0x8000, scoped, tag = 'input window, operand 9, single buffered']
    #allocation14 [shape = 's32[1]{0}', space=sflag, size = 0x4, scoped, tag = 'scoped memory for tpu_custom_call.1']
    #allocation15 [shape = 'u8[8192]{0}', space=vmem, size = 0x2000, scoped, tag = 'output window, operand 0, single buffered']
    %16 = vsyncpa [#allocation5], 0
    %17 = vsyncpa [#allocation3], 0
    %18 = vsyncpa [#allocation8], 0
    %19 = vsyncpa [#allocation11], 0
    %20 = vsyncpa [#allocation14], 0
    %21 = vsyncpa [#allocation4], 0
    // Predicated region
    $region2: #{tpu_custom_call.1} parent=1 // pred_check
      _
    $region3: #{tpu_custom_call.1} parent=1 // pred_check_branch
      %23 = sbr.rel (0) target = $region5
    $region4: #{tpu_custom_call.1} parent=1 // pred_region
      %s25 = ssub.s32 16, 16
      %26 = vsyncadd [#allocation5], %s25
      %29 = dma.hbm_to_smem %s0, 16, [#allocation2], [#allocation5]
    $region5: #{tpu_custom_call.1} parent=1 // pred_fallthru
      _
    // Predicated region
    $region6: #{tpu_custom_call.1} parent=1 // pred_check
      _
    $region7: #{tpu_custom_call.1} parent=1 // pred_check_branch
      %31 = sbr.rel (0) target = $region9
    $region8: #{tpu_custom_call.1} parent=1 // pred_region
      %s33 = ssub.s32 256, 256
      %34 = vsyncadd [#allocation3], %s33
      %s35 = sshll.u32 [#allocation6], 4
      %s36 = int_to_ptr.vmem [resolvable:$true] %s35
      %41 = dma.hbm_to_vmem [thread:$0]  %s1, 256, %s36, [#allocation3], 128, 128, 8
    $region9: #{tpu_custom_call.1} parent=1 // pred_fallthru
      _
    // Predicated region
    $region10: #{tpu_custom_call.1} parent=1 // pred_check
      _
    $region11: #{tpu_custom_call.1} parent=1 // pred_check_branch
      %43 = sbr.rel (0) target = $region13
    $region12: #{tpu_custom_call.1} parent=1 // pred_region
      %s45 = ssub.s32 128, 128
      %46 = vsyncadd [#allocation8], %s45
      %s47 = sshll.u32 [#allocation7], 4
      %s48 = int_to_ptr.vmem [resolvable:$true] %s47
      %53 = dma.hbm_to_vmem [thread:$0]  %s2, 128, %s48, [#allocation8], 64, 64, 4
    $region13: #{tpu_custom_call.1} parent=1 // pred_fallthru
      _
    // Predicated region
    $region14: #{tpu_custom_call.1} parent=1 // pred_check
      _
    $region15: #{tpu_custom_call.1} parent=1 // pred_check_branch
      %55 = sbr.rel (0) target = $region17
    $region16: #{tpu_custom_call.1} parent=1 // pred_region
      %s57 = ssub.s32 1024, 1024
      %58 = vsyncadd [#allocation8], %s57
      %s59 = sshll.u32 [#allocation9], 4
      %s60 = int_to_ptr.vmem [resolvable:$true] %s59
      %65 = dma.hbm_to_vmem [thread:$0]  %s3, 1024, %s60, [#allocation8], 64, 64, 4
    $region17: #{tpu_custom_call.1} parent=1 // pred_fallthru
      _
    // Predicated region
    $region18: #{tpu_custom_call.1} parent=1 // pred_check
      _
    $region19: #{tpu_custom_call.1} parent=1 // pred_check_branch
      %67 = sbr.rel (0) target = $region21
    $region20: #{tpu_custom_call.1} parent=1 // pred_region
      _
    $region21: #{tpu_custom_call.1} parent=1 // pred_fallthru
      _
    // Predicated region
    $region22: #{tpu_custom_call.1} parent=1 // pred_check
      _
    $region23: #{tpu_custom_call.1} parent=1 // pred_check_branch
      %69 = sbr.rel (0) target = $region25
    $region24: #{tpu_custom_call.1} parent=1 // pred_region
      %s71 = ssub.s32 1024, 1024
      %72 = vsyncadd [#allocation11], %s71
      %s73 = sshll.u32 [#allocation10], 4
      %s74 = int_to_ptr.vmem [resolvable:$true] %s73
      %79 = dma.hbm_to_vmem [thread:$0]  %s5, 1024, %s74, [#allocation11], 64, 64, 4
    $region25: #{tpu_custom_call.1} parent=1 // pred_fallthru
      _
    // Predicated region
    $region26: #{tpu_custom_call.1} parent=1 // pred_check
      _
    $region27: #{tpu_custom_call.1} parent=1 // pred_check_branch
      %81 = sbr.rel (0) target = $region29
    $region28: #{tpu_custom_call.1} parent=1 // pred_region
      _
    $region29: #{tpu_custom_call.1} parent=1 // pred_fallthru
      _
    // Predicated region
    $region30: #{tpu_custom_call.1} parent=1 // pred_check
      _
    $region31: #{tpu_custom_call.1} parent=1 // pred_check_branch
      %83 = sbr.rel (0) target = $region33
    $region32: #{tpu_custom_call.1} parent=1 // pred_region
      %s85 = ssub.s32 1024, 1024
      %86 = vsyncadd [#allocation11], %s85
      %s87 = sshll.u32 [#allocation12], 4
      %s88 = int_to_ptr.vmem [resolvable:$true] %s87
      %93 = dma.hbm_to_vmem [thread:$0]  %s7, 1024, %s88, [#allocation11], 64, 64, 4
    $region33: #{tpu_custom_call.1} parent=1 // pred_fallthru
      _
    // Predicated region
    $region34: #{tpu_custom_call.1} parent=1 // pred_check
      _
    $region35: #{tpu_custom_call.1} parent=1 // pred_check_branch
      %95 = sbr.rel (0) target = $region37
    $region36: #{tpu_custom_call.1} parent=1 // pred_region
      _
    $region37: #{tpu_custom_call.1} parent=1 // pred_fallthru
      _
    // Predicated region
    $region38: #{tpu_custom_call.1} parent=1 // pred_check
      _
    $region39: #{tpu_custom_call.1} parent=1 // pred_check_branch
      %97 = sbr.rel (0) target = $region41
    $region40: #{tpu_custom_call.1} parent=1 // pred_region
      %s99 = ssub.s32 1024, 1024
      %100 = vsyncadd [#allocation14], %s99
      %s101 = sshll.u32 [#allocation13], 4
      %s102 = int_to_ptr.vmem [resolvable:$true] %s101
      %107 = dma.hbm_to_vmem [thread:$0]  %s9, 1024, %s102, [#allocation14], 64, 64, 4
    $region41: #{tpu_custom_call.1} parent=1 // pred_fallthru
      _
    // Predicated region
    $region42: #{tpu_custom_call.1} parent=1 // pred_check
      _
    $region43: #{tpu_custom_call.1} parent=1 // pred_check_branch
      %109 = sbr.rel (0) target = $region45
    $region44: #{tpu_custom_call.1} parent=1 // pred_region
      _
    $region45: #{tpu_custom_call.1} parent=1 // pred_fallthru
      _
    // Predicated region
    $region46: #{tpu_custom_call.1} parent=1 // pred_check
      _
    $region47: #{tpu_custom_call.1} parent=1 // pred_check_branch
      %111 = sbr.rel (0) target = $region49
    $region48: #{tpu_custom_call.1} parent=1 // pred_region
      %112 = dma.done [#allocation5], 16
    $region49: #{tpu_custom_call.1} parent=1 // pred_fallthru
      _
    // Predicated region
    $region50: #{tpu_custom_call.1} parent=1 // pred_check
      _
    $region51: #{tpu_custom_call.1} parent=1 // pred_check_branch
      %114 = sbr.rel (0) target = $region53
    $region52: #{tpu_custom_call.1} parent=1 // pred_region
      %115 = dma.done [#allocation3], 256
    $region53: #{tpu_custom_call.1} parent=1 // pred_fallthru
      _
    // Predicated region
    $region54: #{tpu_custom_call.1} parent=1 // pred_check
      _
    $region55: #{tpu_custom_call.1} parent=1 // pred_check_branch
      %117 = sbr.rel (0) target = $region57
    $region56: #{tpu_custom_call.1} parent=1 // pred_region
      %118 = dma.done [#allocation8], 128
    $region57: #{tpu_custom_call.1} parent=1 // pred_fallthru
      _
    // Predicated region
    $region58: #{tpu_custom_call.1} parent=1 // pred_check
      _
    $region59: #{tpu_custom_call.1} parent=1 // pred_check_branch
      %120 = sbr.rel (0) target = $region61
    $region60: #{tpu_custom_call.1} parent=1 // pred_region
      %121 = dma.done [#allocation8], 1024
    $region61: #{tpu_custom_call.1} parent=1 // pred_fallthru
      _
    // Predicated region
    $region62: #{tpu_custom_call.1} parent=1 // pred_check
      _
    $region63: #{tpu_custom_call.1} parent=1 // pred_check_branch
      %123 = sbr.rel (0) target = $region65
    $region64: #{tpu_custom_call.1} parent=1 // pred_region
      %124 = dma.done [#allocation11], 1024
    $region65: #{tpu_custom_call.1} parent=1 // pred_fallthru
      _
    // Predicated region
    $region66: #{tpu_custom_call.1} parent=1 // pred_check
      _
    $region67: #{tpu_custom_call.1} parent=1 // pred_check_branch
      %126 = sbr.rel (0) target = $region69
    $region68: #{tpu_custom_call.1} parent=1 // pred_region
      %127 = dma.done [#allocation11], 1024
    $region69: #{tpu_custom_call.1} parent=1 // pred_fallthru
      _
    // Predicated region
    $region70: #{tpu_custom_call.1} parent=1 // pred_check
      _
    $region71: #{tpu_custom_call.1} parent=1 // pred_check_branch
      %129 = sbr.rel (0) target = $region73
    $region72: #{tpu_custom_call.1} parent=1 // pred_region
      %130 = dma.done [#allocation14], 1024
    $region73: #{tpu_custom_call.1} parent=1 // pred_fallthru
      _
    %131 = sfence
    %v133 = vld [vmem:[#allocation7] sm:$0xf]
    %v134 = vld [vmem:[#allocation7 + $0x4] sm:$0xf]
    %v135 = vld [vmem:[#allocation6] sm:$0xff]
    %v136 = vld [vmem:[#allocation6 + $0x8] sm:$0xff]
    %v137 = vld [vmem:[#allocation9] sm:$0xf]
    %v138 = vld [vmem:[#allocation9 + $0x4] sm:$0xf]
    %v139 = vld [vmem:[#allocation9 + $0x8] sm:$0xf]
    %v140 = vld [vmem:[#allocation9 + $0xc] sm:$0xf]
    %v141 = vld [vmem:[#allocation9 + $0x10] sm:$0xf]
    %v142 = vld [vmem:[#allocation9 + $0x14] sm:$0xf]
    %v143 = vld [vmem:[#allocation9 + $0x18] sm:$0xf]
    %v144 = vld [vmem:[#allocation9 + $0x1c] sm:$0xf]
    %v145 = vld [vmem:[#allocation9 + $0x20] sm:$0xf]
    %v146 = vld [vmem:[#allocation9 + $0x24] sm:$0xf]
    %v147 = vld [vmem:[#allocation9 + $0x28] sm:$0xf]
    %v148 = vld [vmem:[#allocation9 + $0x2c] sm:$0xf]
    %v149 = vld [vmem:[#allocation9 + $0x30] sm:$0xf]
    %v150 = vld [vmem:[#allocation9 + $0x34] sm:$0xf]
    %v151 = vld [vmem:[#allocation9 + $0x38] sm:$0xf]
    %v152 = vld [vmem:[#allocation9 + $0x3c] sm:$0xf]
    %v153 = vld [vmem:[%s4] sm:$0x1]
    %v154 = vld [vmem:[#allocation10] sm:$0xf]
    %v155 = vld [vmem:[#allocation10 + $0x4] sm:$0xf]
    %v156 = vld [vmem:[#allocation10 + $0x8] sm:$0xf]
    %v157 = vld [vmem:[#allocation10 + $0xc] sm:$0xf]
    %v158 = vld [vmem:[#allocation10 + $0x10] sm:$0xf]
    %v159 = vld [vmem:[#allocation10 + $0x14] sm:$0xf]
    %v160 = vld [vmem:[#allocation10 + $0x18] sm:$0xf]
    %v161 = vld [vmem:[#allocation10 + $0x1c] sm:$0xf]
    %v162 = vld [vmem:[#allocation10 + $0x20] sm:$0xf]
    %v163 = vld [vmem:[#allocation10 + $0x24] sm:$0xf]
    %v164 = vld [vmem:[#allocation10 + $0x28] sm:$0xf]
    %v165 = vld [vmem:[#allocation10 + $0x2c] sm:$0xf]
    %v166 = vld [vmem:[#allocation10 + $0x30] sm:$0xf]
    %v167 = vld [vmem:[#allocation10 + $0x34] sm:$0xf]
    %v168 = vld [vmem:[#allocation10 + $0x38] sm:$0xf]
    %v169 = vld [vmem:[#allocation10 + $0x3c] sm:$0xf]
    %v170 = vld [vmem:[%s6] sm:$0x1]
    %s171 = sld [smem:[#allocation2]]
    %s172 = sadd.f32 %s171, 1.0
    %v173 = vpack.c.bf16 %v136, %v135
    %v176 = vunpack.c.l.b16 %v133
    %v177 = vunpack.c.l.b16 %v134
    %v178 = vpack.c.b16 %v177, %v176
    %vm179 = vcmask 130048
    %v181 = vsel %vm179, %v178, 0
    %183 = vmatprep.subr.bf16.mxu0 0
    %184 = vmatpush1.bf16.msra.mxu0 %v173
    %185 = vmatprep.subr.bf16.mxu0 0
    %186 = vmatpush1.bf16.msra.mxu0 0
    %187 = vmatprep.subr.bf16.mxu0 0
    %188 = vmatpush1.bf16.msra.mxu0 0
    %189 = vmatprep.subr.bf16.mxu0 0
    %190 = vmatpush1.bf16.msra.mxu0 0
    %191 = vmatprep.subr.bf16.mxu0 0
    %192 = vmatpush1.bf16.msra.mxu0 0
    %193 = vmatprep.subr.bf16.mxu0 0
    %194 = vmatpush1.bf16.msra.mxu0 0
    %195 = vmatprep.subr.bf16.mxu0 0
    %196 = vmatpush1.bf16.msra.mxu0 0
    %197 = vmatprep.subr.bf16.mxu0 0
    %198 = vmatpush1.bf16.msra.mxu0 0
    %199 = vmatprep.subr.bf16.mxu0 0
    %200 = vmatpush1.bf16.msra.mxu0 0
    %201 = vmatprep.subr.bf16.mxu0 0
    %202 = vmatpush1.bf16.msra.mxu0 0
    %203 = vmatprep.subr.bf16.mxu0 0
    %204 = vmatpush1.bf16.msra.mxu0 0
    %205 = vmatprep.subr.bf16.mxu0 0
    %206 = vmatpush1.bf16.msra.mxu0 0
    %207 = vmatprep.subr.bf16.mxu0 0
    %208 = vmatpush1.bf16.msra.mxu0 0
    %209 = vmatprep.subr.bf16.mxu0 0
    %210 = vmatpush1.bf16.msra.mxu0 0
    %211 = vmatprep.subr.bf16.mxu0 0
    %212 = vmatpush1.bf16.msra.mxu0 0
    %213 = vmatprep.subr.bf16.mxu0 0
    %214 = vmatpush1.bf16.msra.mxu0 0
    %215 = vmatprep.mubr.bf16.mxu0 0
    %216 = vmatmul.mubr.bf16.gmra.mrb[0].mxu0 %v181
    %v217 = vpop.f32.mrb[0].mxu0
    %v218 = vadd.f32 0.0, %v217
    %v219 = vpop.f32.mrb[0].mxu0
    %v220 = vpop.f32.mrb[0].mxu0
    %v221 = vadd.f32 0.0, %v220
    %v222 = vpop.f32.mrb[0].mxu0
    %223 = vdwg.mxu0
    %v224 = vstv %s172
    %v225 = vmul.f32 %v224, %v135
    %v226 = vmul.f32 %v224, %v136
    %v227 = vadd.f32 %v225, %v218
    %v228 = vadd.f32 %v226, %v221
    %v229 = vpack.c.bf16 %v228, %v227
    %v231 = vlaneseq
    %v232 = vshrl.u32 %v231, 7
    %v233 = vsub.s32 0, %v232
    %v234 = vrot.slane %v153, %v233
    %v252 = vunpack.c.l.b16 %v137
    %v253 = vunpack.c.l.b16 %v138
    %v254 = vunpack.c.l.b16 %v139
    %v255 = vunpack.c.l.b16 %v140
    %v256 = vunpack.c.l.b16 %v141
    %v257 = vunpack.c.l.b16 %v142
    %v258 = vunpack.c.l.b16 %v143
    %v259 = vunpack.c.l.b16 %v144
    %v260 = vunpack.c.l.b16 %v145
    %v261 = vunpack.c.l.b16 %v146
    %v262 = vunpack.c.l.b16 %v147
    %v263 = vunpack.c.l.b16 %v148
    %v264 = vunpack.c.l.b16 %v149
    %v265 = vunpack.c.l.b16 %v150
    %v266 = vunpack.c.l.b16 %v151
    %v267 = vunpack.c.l.b16 %v152
    %v268 = vpack.c.b16 %v253, %v252
    %v269 = vpack.c.b16 %v255, %v254
    %v270 = vpack.c.b16 %v257, %v256
    %v271 = vpack.c.b16 %v259, %v258
    %v272 = vpack.c.b16 %v261, %v260
    %v273 = vpack.c.b16 %v263, %v262
    %v274 = vpack.c.b16 %v265, %v264
    %v275 = vpack.c.b16 %v267, %v266
    %284 = vmatprep.subr.bf16.mxu0 0
    %285 = vmatpush1.bf16.msra.mxu0 %v268
    %286 = vmatprep.subr.bf16.mxu0 0
    %287 = vmatpush1.bf16.msra.mxu0 %v269
    %288 = vmatprep.subr.bf16.mxu0 0
    %289 = vmatpush1.bf16.msra.mxu0 %v270
    %290 = vmatprep.subr.bf16.mxu0 0
    %291 = vmatpush1.bf16.msra.mxu0 %v271
    %292 = vmatprep.subr.bf16.mxu0 0
    %293 = vmatpush1.bf16.msra.mxu0 %v272
    %294 = vmatprep.subr.bf16.mxu0 0
    %295 = vmatpush1.bf16.msra.mxu0 %v273
    %296 = vmatprep.subr.bf16.mxu0 0
    %297 = vmatpush1.bf16.msra.mxu0 %v274
    %298 = vmatprep.subr.bf16.mxu0 0
    %299 = vmatpush1.bf16.msra.mxu0 %v275
    %300 = vmatprep.subr.bf16.mxu0 0
    %301 = vmatpush1.bf16.msra.mxu0 0
    %302 = vmatprep.subr.bf16.mxu0 0
    %303 = vmatpush1.bf16.msra.mxu0 0
    %304 = vmatprep.subr.bf16.mxu0 0
    %305 = vmatpush1.bf16.msra.mxu0 0
    %306 = vmatprep.subr.bf16.mxu0 0
    %307 = vmatpush1.bf16.msra.mxu0 0
    %308 = vmatprep.subr.bf16.mxu0 0
    %309 = vmatpush1.bf16.msra.mxu0 0
    %310 = vmatprep.subr.bf16.mxu0 0
    %311 = vmatpush1.bf16.msra.mxu0 0
    %312 = vmatprep.subr.bf16.mxu0 0
    %313 = vmatpush1.bf16.msra.mxu0 0
    %314 = vmatprep.subr.bf16.mxu0 0
    %315 = vmatpush1.bf16.msra.mxu0 0
    %316 = vmatprep.mubr.bf16.mxu0 0
    %317 = vmatmul.mubr.bf16.gmra.mrb[0].mxu0 %v229
    %v318 = vpop.f32.mrb[0].mxu0
    %v319 = vadd.f32 %v234, %v318
    %v320 = vpop.f32.mrb[0].mxu0
    %v321 = vpop.f32.mrb[0].mxu0
    %v322 = vadd.f32 %v234, %v321
    %v323 = vpop.f32.mrb[0].mxu0
    %324 = vdwg.mxu0
    %v325 = vmax.f32 %v319, 0.0
    %v326 = vmax.f32 %v322, 0.0
    %v327 = vpack.c.bf16 %v326, %v325
    %v329 = vlaneseq
    %v330 = vshrl.u32 %v329, 7
    %v331 = vsub.s32 0, %v330
    %v332 = vrot.slane %v170, %v331
    %v350 = vunpack.c.l.b16 %v154
    %v351 = vunpack.c.l.b16 %v155
    %v352 = vunpack.c.l.b16 %v156
    %v353 = vunpack.c.l.b16 %v157
    %v354 = vunpack.c.l.b16 %v158
    %v355 = vunpack.c.l.b16 %v159
    %v356 = vunpack.c.l.b16 %v160
    %v357 = vunpack.c.l.b16 %v161
    %v358 = vunpack.c.l.b16 %v162
    %v359 = vunpack.c.l.b16 %v163
    %v360 = vunpack.c.l.b16 %v164
    %v361 = vunpack.c.l.b16 %v165
    %v362 = vunpack.c.l.b16 %v166
    %v363 = vunpack.c.l.b16 %v167
    %v364 = vunpack.c.l.b16 %v168
    %v365 = vunpack.c.l.b16 %v169
    %v366 = vpack.c.b16 %v351, %v350
    %v367 = vpack.c.b16 %v353, %v352
    %v368 = vpack.c.b16 %v355, %v354
    %v369 = vpack.c.b16 %v357, %v356
    %v370 = vpack.c.b16 %v359, %v358
    %v371 = vpack.c.b16 %v361, %v360
    %v372 = vpack.c.b16 %v363, %v362
    %v373 = vpack.c.b16 %v365, %v364
    %382 = vmatprep.subr.bf16.mxu0 0
    %383 = vmatpush1.bf16.msra.mxu0 %v366
    %384 = vmatprep.subr.bf16.mxu0 0
    %385 = vmatpush1.bf16.msra.mxu0 %v367
    %386 = vmatprep.subr.bf16.mxu0 0
    %387 = vmatpush1.bf16.msra.mxu0 %v368
    %388 = vmatprep.subr.bf16.mxu0 0
    %389 = vmatpush1.bf16.msra.mxu0 %v369
    %390 = vmatprep.subr.bf16.mxu0 0
    %391 = vmatpush1.bf16.msra.mxu0 %v370
    %392 = vmatprep.subr.bf16.mxu0 0
    %393 = vmatpush1.bf16.msra.mxu0 %v371
    %394 = vmatprep.subr.bf16.mxu0 0
    %395 = vmatpush1.bf16.msra.mxu0 %v372
    %396 = vmatprep.subr.bf16.mxu0 0
    %397 = vmatpush1.bf16.msra.mxu0 %v373
    %398 = vmatprep.subr.bf16.mxu0 0
    %399 = vmatpush1.bf16.msra.mxu0 0
    %400 = vmatprep.subr.bf16.mxu0 0
    %401 = vmatpush1.bf16.msra.mxu0 0
    %402 = vmatprep.subr.bf16.mxu0 0
    %403 = vmatpush1.bf16.msra.mxu0 0
    %404 = vmatprep.subr.bf16.mxu0 0
    %405 = vmatpush1.bf16.msra.mxu0 0
    %406 = vmatprep.subr.bf16.mxu0 0
    %407 = vmatpush1.bf16.msra.mxu0 0
    %408 = vmatprep.subr.bf16.mxu0 0
    %409 = vmatpush1.bf16.msra.mxu0 0
    %410 = vmatprep.subr.bf16.mxu0 0
    %411 = vmatpush1.bf16.msra.mxu0 0
    %412 = vmatprep.subr.bf16.mxu0 0
    %413 = vmatpush1.bf16.msra.mxu0 0
    %414 = vmatprep.mubr.bf16.mxu0 0
    %415 = vmatmul.mubr.bf16.gmra.mrb[0].mxu0 %v327
    %v416 = vpop.f32.mrb[0].mxu0
    %v417 = vadd.f32 %v332, %v416
    %v418 = vpop.f32.mrb[0].mxu0
    %v419 = vpop.f32.mrb[0].mxu0
    %v420 = vadd.f32 %v332, %v419
    %v421 = vpop.f32.mrb[0].mxu0
    %422 = vdwg.mxu0
    %v423 = vadd.f32 %v417, %v135
    %v424 = vadd.f32 %v420, %v136
    %v425 = vld [vmem:[#allocation12] sm:$0xf]
    %v426 = vld [vmem:[#allocation12 + $0x4] sm:$0xf]
    %v427 = vld [vmem:[#allocation12 + $0x8] sm:$0xf]
    %v428 = vld [vmem:[#allocation12 + $0xc] sm:$0xf]
    %v429 = vld [vmem:[#allocation12 + $0x10] sm:$0xf]
    %v430 = vld [vmem:[#allocation12 + $0x14] sm:$0xf]
    %v431 = vld [vmem:[#allocation12 + $0x18] sm:$0xf]
    %v432 = vld [vmem:[#allocation12 + $0x1c] sm:$0xf]
    %v433 = vld [vmem:[#allocation12 + $0x20] sm:$0xf]
    %v434 = vld [vmem:[#allocation12 + $0x24] sm:$0xf]
    %v435 = vld [vmem:[#allocation12 + $0x28] sm:$0xf]
    %v436 = vld [vmem:[#allocation12 + $0x2c] sm:$0xf]
    %v437 = vld [vmem:[#allocation12 + $0x30] sm:$0xf]
    %v438 = vld [vmem:[#allocation12 + $0x34] sm:$0xf]
    %v439 = vld [vmem:[#allocation12 + $0x38] sm:$0xf]
    %v440 = vld [vmem:[#allocation12 + $0x3c] sm:$0xf]
    %v441 = vld [vmem:[%s8] sm:$0x1]
    %v442 = vld [vmem:[#allocation13] sm:$0xf]
    %v443 = vld [vmem:[#allocation13 + $0x4] sm:$0xf]
    %v444 = vld [vmem:[#allocation13 + $0x8] sm:$0xf]
    %v445 = vld [vmem:[#allocation13 + $0xc] sm:$0xf]
    %v446 = vld [vmem:[#allocation13 + $0x10] sm:$0xf]
    %v447 = vld [vmem:[#allocation13 + $0x14] sm:$0xf]
    %v448 = vld [vmem:[#allocation13 + $0x18] sm:$0xf]
    %v449 = vld [vmem:[#allocation13 + $0x1c] sm:$0xf]
    %v450 = vld [vmem:[#allocation13 + $0x20] sm:$0xf]
    %v451 = vld [vmem:[#allocation13 + $0x24] sm:$0xf]
    %v452 = vld [vmem:[#allocation13 + $0x28] sm:$0xf]
    %v453 = vld [vmem:[#allocation13 + $0x2c] sm:$0xf]
    %v454 = vld [vmem:[#allocation13 + $0x30] sm:$0xf]
    %v455 = vld [vmem:[#allocation13 + $0x34] sm:$0xf]
    %v456 = vld [vmem:[#allocation13 + $0x38] sm:$0xf]
    %v457 = vld [vmem:[#allocation13 + $0x3c] sm:$0xf]
    %v458 = vld [vmem:[%s10] sm:$0x1]
    %s459 = sld [smem:[#allocation2 + $0x1]]
    %s460 = sadd.f32 %s459, 1.0
    %v461 = vpack.c.bf16 %v424, %v423
    %462 = vmatprep.subr.bf16.mxu0 0
    %463 = vmatpush1.bf16.msra.mxu0 %v461
    %464 = vmatprep.subr.bf16.mxu0 0
    %465 = vmatpush1.bf16.msra.mxu0 0
    %466 = vmatprep.subr.bf16.mxu0 0
    %467 = vmatpush1.bf16.msra.mxu0 0
    %468 = vmatprep.subr.bf16.mxu0 0
    %469 = vmatpush1.bf16.msra.mxu0 0
    %470 = vmatprep.subr.bf16.mxu0 0
    %471 = vmatpush1.bf16.msra.mxu0 0
    %472 = vmatprep.subr.bf16.mxu0 0
    %473 = vmatpush1.bf16.msra.mxu0 0
    %474 = vmatprep.subr.bf16.mxu0 0
    %475 = vmatpush1.bf16.msra.mxu0 0
    %476 = vmatprep.subr.bf16.mxu0 0
    %477 = vmatpush1.bf16.msra.mxu0 0
    %478 = vmatprep.subr.bf16.mxu0 0
    %479 = vmatpush1.bf16.msra.mxu0 0
    %480 = vmatprep.subr.bf16.mxu0 0
    %481 = vmatpush1.bf16.msra.mxu0 0
    %482 = vmatprep.subr.bf16.mxu0 0
    %483 = vmatpush1.bf16.msra.mxu0 0
    %484 = vmatprep.subr.bf16.mxu0 0
    %485 = vmatpush1.bf16.msra.mxu0 0
    %486 = vmatprep.subr.bf16.mxu0 0
    %487 = vmatpush1.bf16.msra.mxu0 0
    %488 = vmatprep.subr.bf16.mxu0 0
    %489 = vmatpush1.bf16.msra.mxu0 0
    %490 = vmatprep.subr.bf16.mxu0 0
    %491 = vmatpush1.bf16.msra.mxu0 0
    %492 = vmatprep.subr.bf16.mxu0 0
    %493 = vmatpush1.bf16.msra.mxu0 0
    %494 = vmatprep.mubr.bf16.mxu0 0
    %495 = vmatmul.mubr.bf16.gmra.mrb[0].mxu0 %v181
    %v496 = vpop.f32.mrb[0].mxu0
    %v497 = vadd.f32 0.0, %v496
    %v498 = vpop.f32.mrb[0].mxu0
    %v499 = vpop.f32.mrb[0].mxu0
    %v500 = vadd.f32 0.0, %v499
    %v501 = vpop.f32.mrb[0].mxu0
    %502 = vdwg.mxu0
    %v503 = vstv %s460
    %v504 = vmul.f32 %v503, %v423
    %v505 = vmul.f32 %v503, %v424
    %v506 = vadd.f32 %v504, %v497
    %v507 = vadd.f32 %v505, %v500
    %v508 = vpack.c.bf16 %v507, %v506
    %v510 = vlaneseq
    %v511 = vshrl.u32 %v510, 7
    %v512 = vsub.s32 0, %v511
    %v513 = vrot.slane %v441, %v512
    %v531 = vunpack.c.l.b16 %v425
    %v532 = vunpack.c.l.b16 %v426
    %v533 = vunpack.c.l.b16 %v427
    %v534 = vunpack.c.l.b16 %v428
    %v535 = vunpack.c.l.b16 %v429
    %v536 = vunpack.c.l.b16 %v430
    %v537 = vunpack.c.l.b16 %v431
    %v538 = vunpack.c.l.b16 %v432
    %v539 = vunpack.c.l.b16 %v433
    %v540 = vunpack.c.l.b16 %v434
    %v541 = vunpack.c.l.b16 %v435
    %v542 = vunpack.c.l.b16 %v436
    %v543 = vunpack.c.l.b16 %v437
    %v544 = vunpack.c.l.b16 %v438
    %v545 = vunpack.c.l.b16 %v439
    %v546 = vunpack.c.l.b16 %v440
    %v547 = vpack.c.b16 %v532, %v531
    %v548 = vpack.c.b16 %v534, %v533
    %v549 = vpack.c.b16 %v536, %v535
    %v550 = vpack.c.b16 %v538, %v537
    %v551 = vpack.c.b16 %v540, %v539
    %v552 = vpack.c.b16 %v542, %v541
    %v553 = vpack.c.b16 %v544, %v543
    %v554 = vpack.c.b16 %v546, %v545
    %563 = vmatprep.subr.bf16.mxu0 0
    %564 = vmatpush1.bf16.msra.mxu0 %v547
    %565 = vmatprep.subr.bf16.mxu0 0
    %566 = vmatpush1.bf16.msra.mxu0 %v548
    %567 = vmatprep.subr.bf16.mxu0 0
    %568 = vmatpush1.bf16.msra.mxu0 %v549
    %569 = vmatprep.subr.bf16.mxu0 0
    %570 = vmatpush1.bf16.msra.mxu0 %v550
    %571 = vmatprep.subr.bf16.mxu0 0
    %572 = vmatpush1.bf16.msra.mxu0 %v551
    %573 = vmatprep.subr.bf16.mxu0 0
    %574 = vmatpush1.bf16.msra.mxu0 %v552
    %575 = vmatprep.subr.bf16.mxu0 0
    %576 = vmatpush1.bf16.msra.mxu0 %v553
    %577 = vmatprep.subr.bf16.mxu0 0
    %578 = vmatpush1.bf16.msra.mxu0 %v554
    %579 = vmatprep.subr.bf16.mxu0 0
    %580 = vmatpush1.bf16.msra.mxu0 0
    %581 = vmatprep.subr.bf16.mxu0 0
    %582 = vmatpush1.bf16.msra.mxu0 0
    %583 = vmatprep.subr.bf16.mxu0 0
    %584 = vmatpush1.bf16.msra.mxu0 0
    %585 = vmatprep.subr.bf16.mxu0 0
    %586 = vmatpush1.bf16.msra.mxu0 0
    %587 = vmatprep.subr.bf16.mxu0 0
    %588 = vmatpush1.bf16.msra.mxu0 0
    %589 = vmatprep.subr.bf16.mxu0 0
    %590 = vmatpush1.bf16.msra.mxu0 0
    %591 = vmatprep.subr.bf16.mxu0 0
    %592 = vmatpush1.bf16.msra.mxu0 0
    %593 = vmatprep.subr.bf16.mxu0 0
    %594 = vmatpush1.bf16.msra.mxu0 0
    %595 = vmatprep.mubr.bf16.mxu0 0
    %596 = vmatmul.mubr.bf16.gmra.mrb[0].mxu0 %v508
    %v597 = vpop.f32.mrb[0].mxu0
    %v598 = vadd.f32 %v513, %v597
    %v599 = vpop.f32.mrb[0].mxu0
    %v600 = vpop.f32.mrb[0].mxu0
    %v601 = vadd.f32 %v513, %v600
    %v602 = vpop.f32.mrb[0].mxu0
    %603 = vdwg.mxu0
    %v604 = vmax.f32 %v598, 0.0
    %v605 = vmax.f32 %v601, 0.0
    %v606 = vpack.c.bf16 %v605, %v604
    %v608 = vlaneseq
    %v609 = vshrl.u32 %v608, 7
    %v610 = vsub.s32 0, %v609
    %v611 = vrot.slane %v458, %v610
    %v629 = vunpack.c.l.b16 %v442
    %v630 = vunpack.c.l.b16 %v443
    %v631 = vunpack.c.l.b16 %v444
    %v632 = vunpack.c.l.b16 %v445
    %v633 = vunpack.c.l.b16 %v446
    %v634 = vunpack.c.l.b16 %v447
    %v635 = vunpack.c.l.b16 %v448
    %v636 = vunpack.c.l.b16 %v449
    %v637 = vunpack.c.l.b16 %v450
    %v638 = vunpack.c.l.b16 %v451
    %v639 = vunpack.c.l.b16 %v452
    %v640 = vunpack.c.l.b16 %v453
    %v641 = vunpack.c.l.b16 %v454
    %v642 = vunpack.c.l.b16 %v455
    %v643 = vunpack.c.l.b16 %v456
    %v644 = vunpack.c.l.b16 %v457
    %v645 = vpack.c.b16 %v630, %v629
    %v646 = vpack.c.b16 %v632, %v631
    %v647 = vpack.c.b16 %v634, %v633
    %v648 = vpack.c.b16 %v636, %v635
    %v649 = vpack.c.b16 %v638, %v637
    %v650 = vpack.c.b16 %v640, %v639
    %v651 = vpack.c.b16 %v642, %v641
    %v652 = vpack.c.b16 %v644, %v643
    %661 = vmatprep.subr.bf16.mxu0 0
    %662 = vmatpush1.bf16.msra.mxu0 %v645
    %663 = vmatprep.subr.bf16.mxu0 0
    %664 = vmatpush1.bf16.msra.mxu0 %v646
    %665 = vmatprep.subr.bf16.mxu0 0
    %666 = vmatpush1.bf16.msra.mxu0 %v647
    %667 = vmatprep.subr.bf16.mxu0 0
    %668 = vmatpush1.bf16.msra.mxu0 %v648
    %669 = vmatprep.subr.bf16.mxu0 0
    %670 = vmatpush1.bf16.msra.mxu0 %v649
    %671 = vmatprep.subr.bf16.mxu0 0
    %672 = vmatpush1.bf16.msra.mxu0 %v650
    %673 = vmatprep.subr.bf16.mxu0 0
    %674 = vmatpush1.bf16.msra.mxu0 %v651
    %675 = vmatprep.subr.bf16.mxu0 0
    %676 = vmatpush1.bf16.msra.mxu0 %v652
    %677 = vmatprep.subr.bf16.mxu0 0
    %678 = vmatpush1.bf16.msra.mxu0 0
    %679 = vmatprep.subr.bf16.mxu0 0
    %680 = vmatpush1.bf16.msra.mxu0 0
    %681 = vmatprep.subr.bf16.mxu0 0
    %682 = vmatpush1.bf16.msra.mxu0 0
    %683 = vmatprep.subr.bf16.mxu0 0
    %684 = vmatpush1.bf16.msra.mxu0 0
    %685 = vmatprep.subr.bf16.mxu0 0
    %686 = vmatpush1.bf16.msra.mxu0 0
    %687 = vmatprep.subr.bf16.mxu0 0
    %688 = vmatpush1.bf16.msra.mxu0 0
    %689 = vmatprep.subr.bf16.mxu0 0
    %690 = vmatpush1.bf16.msra.mxu0 0
    %691 = vmatprep.subr.bf16.mxu0 0
    %692 = vmatpush1.bf16.msra.mxu0 0
    %693 = vmatprep.mubr.bf16.mxu0 0
    %694 = vmatmul.mubr.bf16.gmra.mrb[0].mxu0 %v606
    %v695 = vpop.f32.mrb[0].mxu0
    %v696 = vadd.f32 %v611, %v695
    %v697 = vpop.f32.mrb[0].mxu0
    %v698 = vpop.f32.mrb[0].mxu0
    %v699 = vadd.f32 %v611, %v698
    %v700 = vpop.f32.mrb[0].mxu0
    %701 = vdwg.mxu0
    %v702 = vadd.f32 %v696, %v423
    %v703 = vadd.f32 %v699, %v424
    %704 = vst [vmem:[#allocation15] sm:$0xff] %v702
    %705 = vst [vmem:[#allocation15 + $0x8] sm:$0xff] %v703
    // Predicated region
    $region74: #{tpu_custom_call.1} parent=1 // pred_check
      _
    $region75: #{tpu_custom_call.1} parent=1 // pred_check_branch
      %707 = sbr.rel (0) target = $region77
    $region76: #{tpu_custom_call.1} parent=1 // pred_region
      %s709 = ssub.s32 256, 256
      %710 = vsyncadd [#allocation4], %s709
      %s711 = sshll.u32 [#allocation15], 4
      %s712 = int_to_ptr.vmem [resolvable:$true] %s711
      %717 = dma.vmem_to_hbm [thread:$0]  %s712, 256, %s11, [#allocation4], 128, 128, 8
    $region77: #{tpu_custom_call.1} parent=1 // pred_fallthru
      _
    // Predicated region
    $region78: #{tpu_custom_call.1} parent=1 // pred_check
      _
    $region79: #{tpu_custom_call.1} parent=1 // pred_check_branch
      %719 = sbr.rel (0) target = $region81
    $region80: #{tpu_custom_call.1} parent=1 // pred_region
      %720 = dma.done [#allocation4], 256
    $region81: #{tpu_custom_call.1} parent=1 // pred_fallthru
      _
    %721 = vsyncpa [#allocation3], 1
    %722 = vsyncpa [#allocation8], 1
    %723 = vsyncpa [#allocation11], 1
    %724 = vsyncpa [#allocation14], 1
    %725 = vsyncpa [#allocation4], 1
    %726 = vsyncpa [#allocation5], 1

</llo_original>
